<compile_context>
chip_gen: v7x
topology: tpu7x:2x2x1
jax: 0.10.0
libtpu: 0.0.40
codegen_flags: <defaults>
</compile_context>

<pallas_src>
import functools

import jax
import jax.numpy as jnp
from jax.experimental import pallas as pl
from jax.experimental.pallas import tpu as pltpu

_MXU_DTYPE = jnp.bfloat16  # MXU operand dtype; accumulation is always f32.


def _residual_block_kernel(cin, wp, x_ref, w1_ref, b1_ref, w2_ref, b2_ref,
                           out_ref, patch_ref):
    # x_ref    : (1, Cin, Hp*Wp) bf16  zero-padded input, flat (Hp=H+3, Wp=W+2)
    # w1_ref   : (Cout, 9*Cin)   bf16  3x3 conv weight, K ordered (kh, kw, cin)
    # b1_ref   : (Cout, 1)       f32
    # w2_ref   : (Cout, Cout)    bf16  1x1 conv weight (channel matmul)
    # b2_ref   : (Cout, 1)       f32
    # out_ref  : (1, Cout, H*Wp) f32   (2 junk columns per row, dropped outside)
    # patch_ref: (9*Cin, H*Wp)   bf16  VMEM scratch (im2col slab)
    hws = patch_ref.shape[1]  # = H * Wp

    # Build the im2col slab with nine statically shifted lane slices of the
    # flat padded image (XLU shift work only -- no HBM traffic, overlaps MXU).
    for t in range(9):
        kh, kw = divmod(t, 3)
        off = kh * wp + kw
        patch_ref[t * cin:(t + 1) * cin, :] = x_ref[0, :, off:off + hws]

    patches = patch_ref[...]

    # conv1 (3x3, pad 1, stride 1) as ONE MXU matmul: (Cout,9Cin) x (9Cin,HWs).
    h1 = jnp.dot(w1_ref[...], patches, preferred_element_type=jnp.float32)
    h1 = jnp.maximum(h1 + b1_ref[...], 0.0)            # bias + ReLU in f32

    # conv2 (1x1) as a channel matmul: (Cout,Cout) x (Cout,HWs).
    out = jnp.dot(w2_ref[...], h1.astype(w2_ref.dtype),
                  preferred_element_type=jnp.float32)

    # Identity shortcut == centre tap (kh=1, kw=1) already sitting in the slab.
    shortcut = patches[4 * cin:5 * cin, :].astype(jnp.float32)
    out = out + b2_ref[...] + shortcut                  # bias + residual add (f32)
    out_ref[0] = jnp.maximum(out, 0.0).astype(out_ref.dtype)


@jax.jit
def residual_block(x_nchw, w1, b1, w2, b2):
    """x_nchw: (N, Cin, H, W); w1: (Cout, Cin, 3, 3); w2: (Cout, Cout, 1, 1)."""
    N, Cin, H, W = x_nchw.shape
    Cout = w1.shape[0]
    assert Cin == Cout, "identity-shortcut instantiation requires Cin == Cout"
    Wp = W + 2           # 1-col halo each side
    Hp = H + 3           # 1-row halo top, 2 bottom (extra row keeps every tap
                         # slice of the flattened image in bounds)
    Lp = Hp * Wp
    HWs = H * Wp         # output slab width: W valid + 2 junk columns per row
    K = 9 * Cin

    # --- glue (plain JAX): cast to bf16 BEFORE padding, then flatten ---------
    xpad = jnp.pad(x_nchw.astype(_MXU_DTYPE), ((0, 0), (0, 0), (1, 2), (1, 1)))
    x_flat = xpad.reshape(N, Cin, Lp)
    # torch OIHW -> (O, kh, kw, I) -> (Cout, 9*Cin), matching the slab's K order.
    w1p = jnp.transpose(w1, (0, 2, 3, 1)).reshape(Cout, K).astype(_MXU_DTYPE)
    w2m = w2[:, :, 0, 0].astype(_MXU_DTYPE)             # (Cout, Cout)
    b1c = b1.reshape(Cout, 1).astype(jnp.float32)
    b2c = b2.reshape(Cout, 1).astype(jnp.float32)

    flops = 2 * N * HWs * Cout * (K + Cout)
    bytes_accessed = (x_flat.size * 2 + w1p.size * 2 + w2m.size * 2
                      + (b1c.size + b2c.size) * 4 + N * Cout * HWs * 4)

    # Explicit scoped-VMEM budget (v5e default is 16 MiB; leave headroom).
    lanes = -(-HWs // 128) * 128
    vmem_need = (2 * Cin * Lp * 2                 # x block, double-buffered, bf16
                 + 2 * Cout * lanes * 4           # out block, double-buffered, f32
                 + K * lanes * 2                  # im2col scratch slab, bf16
                 + 4 * Cout * lanes * 4           # h1 / out temporaries, f32
                 + 2 * (w1p.size + w2m.size) * 2
                 + 2 * (b1c.size + b2c.size) * 4)
    vmem_limit = int(min(64 * 2 ** 20, max(2 * vmem_need, 16 * 2 ** 20)))

    kernel = functools.partial(_residual_block_kernel, Cin, Wp)
    out_slab = pl.pallas_call(
        kernel,
        out_shape=jax.ShapeDtypeStruct((N, Cout, HWs), jnp.float32),
        grid_spec=pltpu.PrefetchScalarGridSpec(
            num_scalar_prefetch=0,
            grid=(N,),
            in_specs=[
                pl.BlockSpec((1, Cin, Lp), lambda n: (n, 0, 0)),   # padded x
                pl.BlockSpec((Cout, K), lambda n: (0, 0)),         # w1 packed
                pl.BlockSpec((Cout, 1), lambda n: (0, 0)),         # b1
                pl.BlockSpec((Cout, Cout), lambda n: (0, 0)),      # w2
                pl.BlockSpec((Cout, 1), lambda n: (0, 0)),         # b2
            ],
            out_specs=pl.BlockSpec((1, Cout, HWs), lambda n: (n, 0, 0)),
            scratch_shapes=[pltpu.VMEM((K, HWs), _MXU_DTYPE)],
        ),
        compiler_params=pltpu.CompilerParams(
            dimension_semantics=("parallel",),
            vmem_limit_bytes=vmem_limit),
        cost_estimate=pl.CostEstimate(flops=flops, transcendentals=0,
                                      bytes_accessed=bytes_accessed),
    )(x_flat, w1p, b1c, w2m, b2c)

    # (N, Cout, H*Wp) -> (N, Cout, H, Wp) -> drop the 2 junk columns per row.
    return out_slab.reshape(N, Cout, H, Wp)[:, :, :, :W]


def residual_block_reference(x_nchw, w1, b1, w2, b2):
    """Pure-JAX f32 reference matching the PyTorch forward (NCHW)."""
    out = jax.lax.conv_general_dilated(
        x_nchw, w1, window_strides=(1, 1), padding="SAME",
        dimension_numbers=("NCHW", "OIHW", "NCHW"))
    out = out + b1[None, :, None, None]
    out = jnp.maximum(out, 0.0)
    out = jax.lax.conv_general_dilated(
        out, w2, window_strides=(1, 1), padding="VALID",
        dimension_numbers=("NCHW", "OIHW", "NCHW"))
    out = out + b2[None, :, None, None]
    out = out + x_nchw  # identity shortcut
    return jnp.maximum(out, 0.0)


if __name__ == "__main__":
    key = jax.random.PRNGKey(0)
    N, C, H, W = 2, 32, 16, 16       # in_channels == out_channels, stride = 1

    k_x, k_w1, k_b1, k_w2, k_b2 = jax.random.split(key, 5)
    x = jax.random.normal(k_x, (N, C, H, W), dtype=jnp.float32)
    w1 = jax.random.normal(k_w1, (C, C, 3, 3), dtype=jnp.float32) * 0.1
    b1 = jax.random.normal(k_b1, (C,), dtype=jnp.float32) * 0.1
    w2 = jax.random.normal(k_w2, (C, C, 1, 1), dtype=jnp.float32) * 0.1
    b2 = jax.random.normal(k_b2, (C,), dtype=jnp.float32) * 0.1

    out = jax.block_until_ready(residual_block(x, w1, b1, w2, b2))
    ref = jax.block_until_ready(residual_block_reference(x, w1, b1, w2, b2))

    assert out.shape == (N, C, H, W)
    # bf16 MXU operands / bf16 residual transport (f32 accumulation) vs f32
    # reference -> relaxed tolerance.
    max_err = jnp.max(jnp.abs(out - ref))
    assert jnp.allclose(out, ref, atol=5e-2, rtol=5e-2), f"max abs err {max_err}"
    print("KERNEL_OK")
</pallas_src>

<mosaic_0001>
module attributes {stable_mosaic.version = 11 : i64} {
  func.func @_residual_block_kernel(%arg0: i32, %arg1: memref<1x32x342xbf16, #tpu.memory_space<vmem>>, %arg2: memref<32x288xbf16, #tpu.memory_space<vmem>>, %arg3: memref<32x1xf32, #tpu.memory_space<vmem>>, %arg4: memref<32x32xbf16, #tpu.memory_space<vmem>>, %arg5: memref<32x1xf32, #tpu.memory_space<vmem>>, %arg6: memref<1x32x288xf32, #tpu.memory_space<vmem>>, %arg7: memref<288x288xbf16, #tpu.memory_space<vmem>>) attributes {dimension_semantics = [#tpu.dimension_semantics<parallel>], iteration_bounds = array<i64: 2>, scalar_prefetch = 0 : i64, scratch_operands = 1 : i64, tpu.core_type = #tpu.core_type<tc>, window_params = [{transform_indices = @transform_0, window_bounds = array<i64: 1, 32, 342>}, {pipeline_mode = #tpu.pipeline_mode<synchronous>, transform_indices = @transform_1, window_bounds = array<i64: 32, 288>}, {pipeline_mode = #tpu.pipeline_mode<synchronous>, transform_indices = @transform_2, window_bounds = array<i64: 32, 1>}, {pipeline_mode = #tpu.pipeline_mode<synchronous>, transform_indices = @transform_3, window_bounds = array<i64: 32, 32>}, {pipeline_mode = #tpu.pipeline_mode<synchronous>, transform_indices = @transform_4, window_bounds = array<i64: 32, 1>}, {transform_indices = @transform_5, window_bounds = array<i64: 1, 32, 288>}]} {
    %c0 = arith.constant 0 : index
    %c0_0 = arith.constant 0 : index
    %c0_1 = arith.constant 0 : index
    %0 = vector.load %arg1[%c0, %c0_0, %c0_1] : memref<1x32x342xbf16, #tpu.memory_space<vmem>>, vector<1x32x288xbf16>
    %1 = vector.shape_cast %0 : vector<1x32x288xbf16> to vector<32x288xbf16>
    %c0_2 = arith.constant 0 : index
    %c0_3 = arith.constant 0 : index
    %2 = vector.load %arg7[%c0_2, %c0_3] : memref<288x288xbf16, #tpu.memory_space<vmem>>, vector<32x288xbf16>
    tpu.vector_store %arg7[%c0_2, %c0_3], %1 {strides = array<i32>} : memref<288x288xbf16, #tpu.memory_space<vmem>>, vector<32x288xbf16>,
    %c0_4 = arith.constant 0 : index
    %c0_5 = arith.constant 0 : index
    %c1 = arith.constant 1 : index
    %3 = vector.load %arg1[%c0_4, %c0_5, %c1] : memref<1x32x342xbf16, #tpu.memory_space<vmem>>, vector<1x32x288xbf16>
    %4 = vector.shape_cast %3 : vector<1x32x288xbf16> to vector<32x288xbf16>
    %c32 = arith.constant 32 : index
    %c0_6 = arith.constant 0 : index
    %5 = vector.load %arg7[%c32, %c0_6] : memref<288x288xbf16, #tpu.memory_space<vmem>>, vector<32x288xbf16>
    tpu.vector_store %arg7[%c32, %c0_6], %4 {strides = array<i32>} : memref<288x288xbf16, #tpu.memory_space<vmem>>, vector<32x288xbf16>,
    %c0_7 = arith.constant 0 : index
    %c0_8 = arith.constant 0 : index
    %c2 = arith.constant 2 : index
    %6 = vector.load %arg1[%c0_7, %c0_8, %c2] : memref<1x32x342xbf16, #tpu.memory_space<vmem>>, vector<1x32x288xbf16>
    %7 = vector.shape_cast %6 : vector<1x32x288xbf16> to vector<32x288xbf16>
    %c64 = arith.constant 64 : index
    %c0_9 = arith.constant 0 : index
    %8 = vector.load %arg7[%c64, %c0_9] : memref<288x288xbf16, #tpu.memory_space<vmem>>, vector<32x288xbf16>
    tpu.vector_store %arg7[%c64, %c0_9], %7 {strides = array<i32>} : memref<288x288xbf16, #tpu.memory_space<vmem>>, vector<32x288xbf16>,
    %c0_10 = arith.constant 0 : index
    %c0_11 = arith.constant 0 : index
    %c18 = arith.constant 18 : index
    %9 = vector.load %arg1[%c0_10, %c0_11, %c18] : memref<1x32x342xbf16, #tpu.memory_space<vmem>>, vector<1x32x288xbf16>
    %10 = vector.shape_cast %9 : vector<1x32x288xbf16> to vector<32x288xbf16>
    %c96 = arith.constant 96 : index
    %c0_12 = arith.constant 0 : index
    %11 = vector.load %arg7[%c96, %c0_12] : memref<288x288xbf16, #tpu.memory_space<vmem>>, vector<32x288xbf16>
    tpu.vector_store %arg7[%c96, %c0_12], %10 {strides = array<i32>} : memref<288x288xbf16, #tpu.memory_space<vmem>>, vector<32x288xbf16>,
    %c0_13 = arith.constant 0 : index
    %c0_14 = arith.constant 0 : index
    %c19 = arith.constant 19 : index
    %12 = vector.load %arg1[%c0_13, %c0_14, %c19] : memref<1x32x342xbf16, #tpu.memory_space<vmem>>, vector<1x32x288xbf16>
    %13 = vector.shape_cast %12 : vector<1x32x288xbf16> to vector<32x288xbf16>
    %c128 = arith.constant 128 : index
    %c0_15 = arith.constant 0 : index
    %14 = vector.load %arg7[%c128, %c0_15] : memref<288x288xbf16, #tpu.memory_space<vmem>>, vector<32x288xbf16>
    tpu.vector_store %arg7[%c128, %c0_15], %13 {strides = array<i32>} : memref<288x288xbf16, #tpu.memory_space<vmem>>, vector<32x288xbf16>,
    %c0_16 = arith.constant 0 : index
    %c0_17 = arith.constant 0 : index
    %c20 = arith.constant 20 : index
    %15 = vector.load %arg1[%c0_16, %c0_17, %c20] : memref<1x32x342xbf16, #tpu.memory_space<vmem>>, vector<1x32x288xbf16>
    %16 = vector.shape_cast %15 : vector<1x32x288xbf16> to vector<32x288xbf16>
    %c160 = arith.constant 160 : index
    %c0_18 = arith.constant 0 : index
    %17 = vector.load %arg7[%c160, %c0_18] : memref<288x288xbf16, #tpu.memory_space<vmem>>, vector<32x288xbf16>
    tpu.vector_store %arg7[%c160, %c0_18], %16 {strides = array<i32>} : memref<288x288xbf16, #tpu.memory_space<vmem>>, vector<32x288xbf16>,
    %c0_19 = arith.constant 0 : index
    %c0_20 = arith.constant 0 : index
    %c36 = arith.constant 36 : index
    %18 = vector.load %arg1[%c0_19, %c0_20, %c36] : memref<1x32x342xbf16, #tpu.memory_space<vmem>>, vector<1x32x288xbf16>
    %19 = vector.shape_cast %18 : vector<1x32x288xbf16> to vector<32x288xbf16>
    %c192 = arith.constant 192 : index
    %c0_21 = arith.constant 0 : index
    %20 = vector.load %arg7[%c192, %c0_21] : memref<288x288xbf16, #tpu.memory_space<vmem>>, vector<32x288xbf16>
    tpu.vector_store %arg7[%c192, %c0_21], %19 {strides = array<i32>} : memref<288x288xbf16, #tpu.memory_space<vmem>>, vector<32x288xbf16>,
    %c0_22 = arith.constant 0 : index
    %c0_23 = arith.constant 0 : index
    %c37 = arith.constant 37 : index
    %21 = vector.load %arg1[%c0_22, %c0_23, %c37] : memref<1x32x342xbf16, #tpu.memory_space<vmem>>, vector<1x32x288xbf16>
    %22 = vector.shape_cast %21 : vector<1x32x288xbf16> to vector<32x288xbf16>
    %c224 = arith.constant 224 : index
    %c0_24 = arith.constant 0 : index
    %23 = vector.load %arg7[%c224, %c0_24] : memref<288x288xbf16, #tpu.memory_space<vmem>>, vector<32x288xbf16>
    tpu.vector_store %arg7[%c224, %c0_24], %22 {strides = array<i32>} : memref<288x288xbf16, #tpu.memory_space<vmem>>, vector<32x288xbf16>,
    %c0_25 = arith.constant 0 : index
    %c0_26 = arith.constant 0 : index
    %c38 = arith.constant 38 : index
    %24 = vector.load %arg1[%c0_25, %c0_26, %c38] : memref<1x32x342xbf16, #tpu.memory_space<vmem>>, vector<1x32x288xbf16>
    %25 = vector.shape_cast %24 : vector<1x32x288xbf16> to vector<32x288xbf16>
    %c256 = arith.constant 256 : index
    %c0_27 = arith.constant 0 : index
    %26 = vector.load %arg7[%c256, %c0_27] : memref<288x288xbf16, #tpu.memory_space<vmem>>, vector<32x288xbf16>
    tpu.vector_store %arg7[%c256, %c0_27], %25 {strides = array<i32>} : memref<288x288xbf16, #tpu.memory_space<vmem>>, vector<32x288xbf16>,
    %c0_28 = arith.constant 0 : index
    %c0_29 = arith.constant 0 : index
    %27 = vector.load %arg7[%c0_28, %c0_29] : memref<288x288xbf16, #tpu.memory_space<vmem>>, vector<288x288xbf16>
    %c0_30 = arith.constant 0 : index
    %c0_31 = arith.constant 0 : index
    %28 = vector.load %arg2[%c0_30, %c0_31] : memref<32x288xbf16, #tpu.memory_space<vmem>>, vector<32x288xbf16>
    %cst = arith.constant dense<0.000000e+00> : vector<32x288xf32>
    %29 = tpu.matmul %28, %27, %cst {dimension_numbers = #tpu.dot_dimension_numbers<[1], [0], [0], [1], [0, 0, 1, 1], [], []>} : vector<32x288xbf16>, vector<288x288xbf16>, vector<32x288xf32> -> vector<32x288xf32>
    %c0_32 = arith.constant 0 : index
    %c0_33 = arith.constant 0 : index
    %30 = vector.load %arg3[%c0_32, %c0_33] : memref<32x1xf32, #tpu.memory_space<vmem>>, vector<32x1xf32>
    %31 = vector.broadcast %30 : vector<32x1xf32> to vector<32x288xf32>
    %32 = arith.addf %29, %31 : vector<32x288xf32>
    %cst_34 = arith.constant 0.000000e+00 : f32
    %33 = vector.broadcast %cst_34 : f32 to vector<32x288xf32>
    %34 = arith.maximumf %32, %33 : vector<32x288xf32>
    %c0_35 = arith.constant 0 : index
    %c0_36 = arith.constant 0 : index
    %35 = vector.load %arg4[%c0_35, %c0_36] : memref<32x32xbf16, #tpu.memory_space<vmem>>, vector<32x32xbf16>
    %36 = arith.truncf %34 : vector<32x288xf32> to vector<32x288xbf16>
    %cst_37 = arith.constant dense<0.000000e+00> : vector<32x288xf32>
    %37 = tpu.matmul %35, %36, %cst_37 {dimension_numbers = #tpu.dot_dimension_numbers<[1], [0], [0], [1], [0, 0, 1, 1], [], []>} : vector<32x32xbf16>, vector<32x288xbf16>, vector<32x288xf32> -> vector<32x288xf32>
    %38 = vector.extract_strided_slice %27 {offsets = [128, 0], sizes = [32, 288], strides = [1, 1]} : vector<288x288xbf16> to vector<32x288xbf16>
    %39 = arith.extf %38 : vector<32x288xbf16> to vector<32x288xf32>
    %c0_38 = arith.constant 0 : index
    %c0_39 = arith.constant 0 : index
    %40 = vector.load %arg5[%c0_38, %c0_39] : memref<32x1xf32, #tpu.memory_space<vmem>>, vector<32x1xf32>
    %41 = vector.broadcast %40 : vector<32x1xf32> to vector<32x288xf32>
    %42 = arith.addf %37, %41 : vector<32x288xf32>
    %43 = arith.addf %42, %39 : vector<32x288xf32>
    %cst_40 = arith.constant 0.000000e+00 : f32
    %44 = vector.broadcast %cst_40 : f32 to vector<32x288xf32>
    %45 = arith.maximumf %43, %44 : vector<32x288xf32>
    %c0_41 = arith.constant 0 : index
    %c0_42 = arith.constant 0 : index
    %c0_43 = arith.constant 0 : index
    %46 = vector.load %arg6[%c0_41, %c0_42, %c0_43] : memref<1x32x288xf32, #tpu.memory_space<vmem>>, vector<1x32x288xf32>
    %47 = vector.shape_cast %46 : vector<1x32x288xf32> to vector<32x288xf32>
    %48 = vector.shape_cast %45 : vector<32x288xf32> to vector<1x32x288xf32>
    tpu.vector_store %arg6[%c0_41, %c0_42, %c0_43], %48 {strides = array<i32>} : memref<1x32x288xf32, #tpu.memory_space<vmem>>, vector<1x32x288xf32>,
    return
  }
  func.func @transform_0(%arg0: i32) -> (i32, i32, i32) {
    %c0_i32 = arith.constant 0 : i32
    %c0_i32_0 = arith.constant 0 : i32
    %c0_i32_1 = arith.constant 0 : i32
    return %arg0, %c0_i32, %c0_i32_0 : i32, i32, i32
  }
  func.func @transform_1(%arg0: i32) -> (i32, i32) {
    %c0_i32 = arith.constant 0 : i32
    %c0_i32_0 = arith.constant 0 : i32
    %c0_i32_1 = arith.constant 0 : i32
    return %c0_i32, %c0_i32_0 : i32, i32
  }
  func.func @transform_2(%arg0: i32) -> (i32, i32) {
    %c0_i32 = arith.constant 0 : i32
    %c0_i32_0 = arith.constant 0 : i32
    %c0_i32_1 = arith.constant 0 : i32
    return %c0_i32, %c0_i32_0 : i32, i32
  }
  func.func @transform_3(%arg0: i32) -> (i32, i32) {
    %c0_i32 = arith.constant 0 : i32
    %c0_i32_0 = arith.constant 0 : i32
    %c0_i32_1 = arith.constant 0 : i32
    return %c0_i32, %c0_i32_0 : i32, i32
  }
  func.func @transform_4(%arg0: i32) -> (i32, i32) {
    %c0_i32 = arith.constant 0 : i32
    %c0_i32_0 = arith.constant 0 : i32
    %c0_i32_1 = arith.constant 0 : i32
    return %c0_i32, %c0_i32_0 : i32, i32
  }
  func.func @transform_5(%arg0: i32) -> (i32, i32, i32) {
    %c0_i32 = arith.constant 0 : i32
    %c0_i32_0 = arith.constant 0 : i32
    %c0_i32_1 = arith.constant 0 : i32
    return %arg0, %c0_i32, %c0_i32_0 : i32, i32, i32
  }
}

</mosaic_0001>

<llo_original>
// kernel: residual_block.1
$region0: #{residual_block.1}
  #allocation0 [shape = 'u32[]', space=smem, size = 0x4, offset = 0x4, fixed_abs, tag = 'smem constant byte address 0x4 - core index']
  #allocation1 [shape = 'u32[144,128]{1,0:T(1,128)}', space=vmem, size = 0x12000, scoped, tag = 'internal scratch']
  #allocation2 [shape = 'bf16[288,288]{1,0:T(16,128)(2,1)}', space=vmem, size = 0x36000, scoped, tag = 'scratch operand']
  %s0 = inlined_call_operand.vmem [shape: bf16[2,32,342], index: 0, kind: input, shape index: {}]
  %s1 = inlined_call_operand.vmem [shape: bf16[32,288], index: 1, kind: input, shape index: {}]
  %s2 = inlined_call_operand.vmem [shape: f32[32,1], index: 2, kind: input, shape index: {}]
  %s3 = inlined_call_operand.vmem [shape: bf16[32,32], index: 3, kind: input, shape index: {}]
  %s4 = inlined_call_operand.vmem [shape: f32[32,1], index: 4, kind: input, shape index: {}]
  %s5 = inlined_call_operand.vmem [shape: f32[2,32,288], index: 5, kind: output, shape index: {}]
  %s6 = sld [smem:[#allocation0]]
  $region53: #{residual_block.1} parent=0
    _
  %s8 = ssub.s32 1, %s6
  %s9 = scalar_select 0, %s8, %s6
  loop: start=0, step=1, limit=4
  $region2: #{residual_block.1} parent=0 // loop_pre_header
    _
  $region3: #{residual_block.1} parent=0 // loop_header
    %s11 = sphi 0, %s15
    %p12 = scmp.ge.s32.totalorder %s11, 4
    %s21 = sphi 0, %s23
    %s24 = sphi 0, %s21
    %s25 = sphi 0, %s24
    %s41 = sphi 0, %s25
    %s45 = sphi 0, %s45
    %s47 = sphi 0, %s45
    %s48 = sphi 0, %s47
    %s62 = sphi 0, %s48
    %s66 = sphi 0, %s66
    %s68 = sphi 0, %s66
    %s69 = sphi 0, %s68
    %s83 = sphi 0, %s69
    %s87 = sphi 0, %s87
    %s89 = sphi 0, %s87
    %s90 = sphi 0, %s89
    %s104 = sphi 0, %s90
    %s108 = sphi 0, %s108
    %s110 = sphi 0, %s108
    %s111 = sphi 0, %s110
    %s125 = sphi 0, %s111
    %s131 = sphi 0, %s133
    %s134 = sphi 0, %s131
    %s135 = sphi 0, %s134
    %s151 = sphi 0, %s135
  $region4: #{residual_block.1} parent=0 // loop_header_branch
    %14 = sbr.rel (%p12) target = $region8
  $region5: #{residual_block.1} parent=0 // loop_body
    %s16 = ssub.s32 %s11, 1
    %s17 = ssub.s32 %s11, 2
    %s18 = sadd.s32 %s11, 1
    %s19 = ssub.s32 %s11, %s18
    %p20 = scmp.eq.s32.totalorder %s19, 0
    %s22 = sadd.s32 %s21, 1
    %s23 = scalar_select %p20, %s21, %s22
    %p26 = pneg %p20
    %p27 = scmp.eq.s32.totalorder %s11, 1
    %p28 = por %p26, %p27
    %p29 = scmp.ne.s32.totalorder %s21, %s24
    %p30 = scmp.eq.s32.totalorder %s11, 0
    %p31 = por %p29, %p30
    %p32 = scmp.ne.s32.totalorder %s21, %s24
    %p33 = scmp.eq.s32.totalorder %s16, 1
    %p34 = por %p32, %p33
    %p35 = scmp.ne.s32.totalorder %s24, %s25
    %p36 = scmp.eq.s32.totalorder %s16, 0
    %p37 = por %p35, %p36
    %p38 = scmp.ne.s32.totalorder %s24, %s25
    %p39 = scmp.eq.s32.totalorder %s17, 1
    %p40 = por %p38, %p39
    %p42 = scmp.ne.s32.totalorder %s25, %s41
    %p43 = scmp.eq.s32.totalorder %s17, 0
    %p44 = por %p42, %p43
    %s46 = sadd.s32 %s45, 1
    %p49 = scmp.eq.s32.totalorder %s11, 1
    %p50 = scmp.ne.s32.totalorder %s45, %s47
    %p51 = scmp.eq.s32.totalorder %s11, 0
    %p52 = por %p50, %p51
    %p53 = scmp.ne.s32.totalorder %s45, %s47
    %p54 = scmp.eq.s32.totalorder %s16, 1
    %p55 = por %p53, %p54
    %p56 = scmp.ne.s32.totalorder %s47, %s48
    %p57 = scmp.eq.s32.totalorder %s16, 0
    %p58 = por %p56, %p57
    %p59 = scmp.ne.s32.totalorder %s47, %s48
    %p60 = scmp.eq.s32.totalorder %s17, 1
    %p61 = por %p59, %p60
    %p63 = scmp.ne.s32.totalorder %s48, %s62
    %p64 = scmp.eq.s32.totalorder %s17, 0
    %p65 = por %p63, %p64
    %s67 = sadd.s32 %s66, 1
    %p70 = scmp.eq.s32.totalorder %s11, 1
    %p71 = scmp.ne.s32.totalorder %s66, %s68
    %p72 = scmp.eq.s32.totalorder %s11, 0
    %p73 = por %p71, %p72
    %p74 = scmp.ne.s32.totalorder %s66, %s68
    %p75 = scmp.eq.s32.totalorder %s16, 1
    %p76 = por %p74, %p75
    %p77 = scmp.ne.s32.totalorder %s68, %s69
    %p78 = scmp.eq.s32.totalorder %s16, 0
    %p79 = por %p77, %p78
    %p80 = scmp.ne.s32.totalorder %s68, %s69
    %p81 = scmp.eq.s32.totalorder %s17, 1
    %p82 = por %p80, %p81
    %p84 = scmp.ne.s32.totalorder %s69, %s83
    %p85 = scmp.eq.s32.totalorder %s17, 0
    %p86 = por %p84, %p85
    %s88 = sadd.s32 %s87, 1
    %p91 = scmp.eq.s32.totalorder %s11, 1
    %p92 = scmp.ne.s32.totalorder %s87, %s89
    %p93 = scmp.eq.s32.totalorder %s11, 0
    %p94 = por %p92, %p93
    %p95 = scmp.ne.s32.totalorder %s87, %s89
    %p96 = scmp.eq.s32.totalorder %s16, 1
    %p97 = por %p95, %p96
    %p98 = scmp.ne.s32.totalorder %s89, %s90
    %p99 = scmp.eq.s32.totalorder %s16, 0
    %p100 = por %p98, %p99
    %p101 = scmp.ne.s32.totalorder %s89, %s90
    %p102 = scmp.eq.s32.totalorder %s17, 1
    %p103 = por %p101, %p102
    %p105 = scmp.ne.s32.totalorder %s90, %s104
    %p106 = scmp.eq.s32.totalorder %s17, 0
    %p107 = por %p105, %p106
    %s109 = sadd.s32 %s108, 1
    %p112 = scmp.eq.s32.totalorder %s11, 1
    %p113 = scmp.ne.s32.totalorder %s108, %s110
    %p114 = scmp.eq.s32.totalorder %s11, 0
    %p115 = por %p113, %p114
    %p116 = scmp.ne.s32.totalorder %s108, %s110
    %p117 = scmp.eq.s32.totalorder %s16, 1
    %p118 = por %p116, %p117
    %p119 = scmp.ne.s32.totalorder %s110, %s111
    %p120 = scmp.eq.s32.totalorder %s16, 0
    %p121 = por %p119, %p120
    %p122 = scmp.ne.s32.totalorder %s110, %s111
    %p123 = scmp.eq.s32.totalorder %s17, 1
    %p124 = por %p122, %p123
    %p126 = scmp.ne.s32.totalorder %s111, %s125
    %p127 = scmp.eq.s32.totalorder %s17, 0
    %p128 = por %p126, %p127
    %s129 = ssub.s32 %s11, %s18
    %p130 = scmp.eq.s32.totalorder %s129, 0
    %s132 = sadd.s32 %s131, 1
    %s133 = scalar_select %p130, %s131, %s132
    %p136 = pneg %p130
    %p137 = scmp.eq.s32.totalorder %s11, 1
    %p138 = por %p136, %p137
    %p139 = scmp.ne.s32.totalorder %s131, %s134
    %p140 = scmp.eq.s32.totalorder %s11, 0
    %p141 = por %p139, %p140
    %p142 = scmp.ne.s32.totalorder %s131, %s134
    %p143 = scmp.eq.s32.totalorder %s16, 1
    %p144 = por %p142, %p143
    %p145 = scmp.ne.s32.totalorder %s134, %s135
    %p146 = scmp.eq.s32.totalorder %s16, 0
    %p147 = por %p145, %p146
    %p148 = scmp.ne.s32.totalorder %s134, %s135
    %p149 = scmp.eq.s32.totalorder %s17, 1
    %p150 = por %p148, %p149
    %p152 = scmp.ne.s32.totalorder %s135, %s151
    %p153 = scmp.eq.s32.totalorder %s17, 0
    %p154 = por %p152, %p153
    %p155 = scmp.le.s32.totalorder 1, %s11
    %p156 = scmp.lt.s32.totalorder %s11, 3
    %p157 = pnand %p155, %p156
    %p158 = pneg %p157
    // Predicated region
    $region9: #{residual_block.1} parent=5 // pred_check
      _
    $region10: #{residual_block.1} parent=5 // pred_check_branch
      %160 = sbr.rel (%p157) target = $region12
    $region11: #{residual_block.1} parent=5 // pred_region
      %s161 = ssub.s32 %s11, 1
      // Predicated region
      $region13: #{residual_block.1} parent=11 // pred_check
        %p162 = pneg %p58
      $region14: #{residual_block.1} parent=11 // pred_check_branch
        %164 = sbr.rel (%p162) target = $region16
      $region15: #{residual_block.1} parent=11 // pred_region
        _
      $region16: #{residual_block.1} parent=11 // pred_fallthru
        _
      // Predicated region
      $region17: #{residual_block.1} parent=11 // pred_check
        %p165 = pneg %p79
      $region18: #{residual_block.1} parent=11 // pred_check_branch
        %167 = sbr.rel (%p165) target = $region20
      $region19: #{residual_block.1} parent=11 // pred_region
        _
      $region20: #{residual_block.1} parent=11 // pred_fallthru
        _
      // Predicated region
      $region21: #{residual_block.1} parent=11 // pred_check
        %p168 = pneg %p100
      $region22: #{residual_block.1} parent=11 // pred_check_branch
        %170 = sbr.rel (%p168) target = $region24
      $region23: #{residual_block.1} parent=11 // pred_region
        _
      $region24: #{residual_block.1} parent=11 // pred_fallthru
        _
      // Predicated region
      $region25: #{residual_block.1} parent=11 // pred_check
        %p171 = pneg %p121
      $region26: #{residual_block.1} parent=11 // pred_check_branch
        %173 = sbr.rel (%p171) target = $region28
      $region27: #{residual_block.1} parent=11 // pred_region
        _
      $region28: #{residual_block.1} parent=11 // pred_fallthru
        _
    $region12: #{residual_block.1} parent=5 // pred_fallthru
      _
    %p174 = scmp.lt.s32.totalorder %s11, 2
    // Predicated region
    $region29: #{residual_block.1} parent=5 // pred_check
      %p175 = pneg %p174
    $region30: #{residual_block.1} parent=5 // pred_check_branch
      %177 = sbr.rel (%p175) target = $region32
    $region31: #{residual_block.1} parent=5 // pred_region
      // Predicated region
      $region33: #{residual_block.1} parent=31 // pred_check
        %p178 = pneg %p31
      $region34: #{residual_block.1} parent=31 // pred_check_branch
        %180 = sbr.rel (%p178) target = $region36
      $region35: #{residual_block.1} parent=31 // pred_region
        %p181 = scmp.lt.s32.totalorder %s11, 1
        %s182 = scalar_select %p181, %s11, 1
        %s183 = smul.addr %s182, 12
        %s184 = smul.addr %s183, 4
        %s185 = scalar_lea.vmem %s0, %s184
      $region36: #{residual_block.1} parent=31 // pred_fallthru
        _
    $region32: #{residual_block.1} parent=5 // pred_fallthru
      _
    %p186 = scmp.le.s32.totalorder 1, %s11
    %p187 = scmp.lt.s32.totalorder %s11, 3
    %p188 = pnand %p186, %p187
    %p189 = pneg %p188
    // Predicated region
    $region37: #{residual_block.1} parent=5 // pred_check
      _
    $region38: #{residual_block.1} parent=5 // pred_check_branch
      %191 = sbr.rel (%p188) target = $region40
    $region39: #{residual_block.1} parent=5 // pred_region
      %s192 = ssub.s32 %s11, 1
      %p193 = scmp.lt.s32.totalorder %s16, 1
      %s194 = scalar_select %p193, %s16, 1
      %s195 = smul.addr %s194, 12
      %s196 = smul.addr %s195, 4
      %s197 = scalar_lea.vmem %s0, %s196
      %p198 = pneg %p37
      %p199 = pneg %p34
      %p200 = pneg %p58
      %p201 = pneg %p55
      %p202 = pneg %p79
      %p203 = pneg %p76
      %p204 = pneg %p100
      %p205 = pneg %p97
      %p206 = pneg %p121
      %p207 = pneg %p118
      %p208 = pneg %p147
      %p209 = pneg %p144
      %p210 = scmp.lt.s32.totalorder %s16, 1
      %s211 = scalar_select %p210, %s16, 1
      %s212 = smul.addr %s211, 12
      %s213 = smul.addr %s212, 8
      %s214 = scalar_lea.vmem %s5, %s213
      %p215 = scmp.lt.s32.totalorder %s16, 1
      %s216 = scalar_select %p215, %s16, 1
      %s217 = smul.addr %s216, 12
      %s218 = smul.addr %s217, 4
      %s219 = scalar_lea.vmem %s0, %s218
      %p220 = scmp.lt.s32.totalorder %s16, 1
      %s221 = scalar_select %p220, %s16, 1
      %s222 = smul.addr %s221, 12
      %s223 = smul.addr %s222, 8
      %s224 = scalar_lea.vmem %s5, %s223
      %v226 = vld [vmem:[%s219] sm:$0xff]
      %v227 = vld [vmem:[%s219 + $0x8] sm:$0xf]
      %v228 = vld [vmem:[%s219 + $0xc] sm:$0xff]
      %v229 = vld [vmem:[%s219 + $0x14] sm:$0xf]
      %v230 = vld [vmem:[%s219 + $0x18] sm:$0xff]
      %v231 = vld [vmem:[%s219 + $0x20] sm:$0xf]
      %v232 = vld [vmem:[%s219 + $0x24] sm:$0xff]
      %v233 = vld [vmem:[%s219 + $0x2c] sm:$0xf]
      %v242 = vunpack.c.l.b16 %v226
      %v243 = vunpack.c.h.b16 %v226
      %v244 = vunpack.c.l.b16 %v227
      %v245 = vunpack.c.l.b16 %v228
      %v246 = vunpack.c.h.b16 %v228
      %v247 = vunpack.c.l.b16 %v229
      %v248 = vunpack.c.l.b16 %v230
      %v249 = vunpack.c.h.b16 %v230
      %v250 = vunpack.c.l.b16 %v231
      %v251 = vunpack.c.l.b16 %v232
      %v252 = vunpack.c.h.b16 %v232
      %v253 = vunpack.c.l.b16 %v233
      %v254 = vpack.c.b16 %v245, %v242
      %v255 = vpack.c.b16 %v246, %v243
      %v256 = vpack.c.b16 %v247, %v244
      %v257 = vpack.c.b16 %v251, %v248
      %v258 = vpack.c.b16 %v252, %v249
      %v259 = vpack.c.b16 %v253, %v250
      %266 = vst [vmem:[#allocation2] sm:$0xff] %v254
      %267 = vst [vmem:[#allocation2 + $0x8] sm:$0xff] %v255
      %vm268 = vcmask 261120
      %269 = vst.msk [vmem:[#allocation2 + $0x10] sm:$0xff] %vm268, %v256
      %270 = vst [vmem:[#allocation2 + $0x18] sm:$0xff] %v257
      %271 = vst [vmem:[#allocation2 + $0x20] sm:$0xff] %v258
      %272 = vst.msk [vmem:[#allocation2 + $0x28] sm:$0xff] %vm268, %v259
      %v273 = vld [vmem:[%s219] sm:$0xff]
      %v274 = vld [vmem:[%s219 + $0x8] sm:$0xf]
      %v275 = vld [vmem:[%s219 + $0xc] sm:$0xff]
      %v276 = vld [vmem:[%s219 + $0x14] sm:$0xf]
      %v277 = vld [vmem:[%s219 + $0x18] sm:$0xff]
      %v278 = vld [vmem:[%s219 + $0x20] sm:$0xf]
      %v279 = vld [vmem:[%s219 + $0x24] sm:$0xff]
      %v280 = vld [vmem:[%s219 + $0x2c] sm:$0xf]
      %v289 = vunpack.c.l.b16 %v273
      %v290 = vunpack.c.h.b16 %v273
      %v291 = vunpack.c.l.b16 %v274
      %v292 = vunpack.c.l.b16 %v275
      %v293 = vunpack.c.h.b16 %v275
      %v294 = vunpack.c.l.b16 %v276
      %v295 = vunpack.c.l.b16 %v277
      %v296 = vunpack.c.h.b16 %v277
      %v297 = vunpack.c.l.b16 %v278
      %v298 = vunpack.c.l.b16 %v279
      %v299 = vunpack.c.h.b16 %v279
      %v300 = vunpack.c.l.b16 %v280
      %v301 = vpack.c.b16 %v292, %v289
      %v302 = vpack.c.b16 %v293, %v290
      %v303 = vpack.c.b16 %v294, %v291
      %v304 = vpack.c.b16 %v298, %v295
      %v305 = vpack.c.b16 %v299, %v296
      %v306 = vpack.c.b16 %v300, %v297
      %307 = vrot.lane.b32.xlu0 %v301, 127
      %v308 = vpop.permute.xlu0 %307
      %309 = vrot.lane.b32.xlu0 %v302, 127
      %v310 = vpop.permute.xlu0 %309
      %311 = vrot.lane.b32.xlu0 %v303, 127
      %v312 = vpop.permute.xlu0 %311
      %313 = vrot.lane.b32.xlu0 %v304, 127
      %v314 = vpop.permute.xlu0 %313
      %315 = vrot.lane.b32.xlu0 %v305, 127
      %v316 = vpop.permute.xlu0 %315
      %317 = vrot.lane.b32.xlu0 %v306, 127
      %v318 = vpop.permute.xlu0 %317
      %vm319 = vcmask 1039360
      %v320 = vsel %vm319, %v308, %v310
      %v321 = vsel %vm319, %v310, %v312
      %v322 = vsel %vm319, %v314, %v316
      %v323 = vsel %vm319, %v316, %v318
      %330 = vst [vmem:[#allocation2 + $0x30] sm:$0xff] %v320
      %331 = vst [vmem:[#allocation2 + $0x38] sm:$0xff] %v321
      %332 = vst.msk [vmem:[#allocation2 + $0x40] sm:$0xff] %vm268, %v312
      %333 = vst [vmem:[#allocation2 + $0x48] sm:$0xff] %v322
      %334 = vst [vmem:[#allocation2 + $0x50] sm:$0xff] %v323
      %335 = vst.msk [vmem:[#allocation2 + $0x58] sm:$0xff] %vm268, %v318
      %v336 = vld [vmem:[%s219] sm:$0xff]
      %v337 = vld [vmem:[%s219 + $0x8] sm:$0xf]
      %v338 = vld [vmem:[%s219 + $0xc] sm:$0xff]
      %v339 = vld [vmem:[%s219 + $0x14] sm:$0xf]
      %v340 = vld [vmem:[%s219 + $0x18] sm:$0xff]
      %v341 = vld [vmem:[%s219 + $0x20] sm:$0xf]
      %v342 = vld [vmem:[%s219 + $0x24] sm:$0xff]
      %v343 = vld [vmem:[%s219 + $0x2c] sm:$0xf]
      %v352 = vunpack.c.l.b16 %v336
      %v353 = vunpack.c.h.b16 %v336
      %v354 = vunpack.c.l.b16 %v337
      %v355 = vunpack.c.l.b16 %v338
      %v356 = vunpack.c.h.b16 %v338
      %v357 = vunpack.c.l.b16 %v339
      %v358 = vunpack.c.l.b16 %v340
      %v359 = vunpack.c.h.b16 %v340
      %v360 = vunpack.c.l.b16 %v341
      %v361 = vunpack.c.l.b16 %v342
      %v362 = vunpack.c.h.b16 %v342
      %v363 = vunpack.c.l.b16 %v343
      %v364 = vpack.c.b16 %v355, %v352
      %v365 = vpack.c.b16 %v356, %v353
      %v366 = vpack.c.b16 %v357, %v354
      %v367 = vpack.c.b16 %v361, %v358
      %v368 = vpack.c.b16 %v362, %v359
      %v369 = vpack.c.b16 %v363, %v360
      %370 = vrot.lane.b32.xlu0 %v364, 126
      %v371 = vpop.permute.xlu0 %370
      %372 = vrot.lane.b32.xlu0 %v365, 126
      %v373 = vpop.permute.xlu0 %372
      %374 = vrot.lane.b32.xlu0 %v366, 126
      %v375 = vpop.permute.xlu0 %374
      %376 = vrot.lane.b32.xlu0 %v367, 126
      %v377 = vpop.permute.xlu0 %376
      %378 = vrot.lane.b32.xlu0 %v368, 126
      %v379 = vpop.permute.xlu0 %378
      %380 = vrot.lane.b32.xlu0 %v369, 126
      %v381 = vpop.permute.xlu0 %380
      %vm382 = vcmask 1031168
      %v383 = vsel %vm382, %v371, %v373
      %v384 = vsel %vm382, %v373, %v375
      %v385 = vsel %vm382, %v377, %v379
      %v386 = vsel %vm382, %v379, %v381
      %393 = vst [vmem:[#allocation2 + $0x60] sm:$0xff] %v383
      %394 = vst [vmem:[#allocation2 + $0x68] sm:$0xff] %v384
      %395 = vst.msk [vmem:[#allocation2 + $0x70] sm:$0xff] %vm268, %v375
      %396 = vst [vmem:[#allocation2 + $0x78] sm:$0xff] %v385
      %397 = vst [vmem:[#allocation2 + $0x80] sm:$0xff] %v386
      %398 = vst.msk [vmem:[#allocation2 + $0x88] sm:$0xff] %vm268, %v381
      %v399 = vld [vmem:[%s219] sm:$0xff]
      %v400 = vld [vmem:[%s219 + $0x8] sm:$0xf]
      %v401 = vld [vmem:[%s219 + $0xc] sm:$0xff]
      %v402 = vld [vmem:[%s219 + $0x14] sm:$0xf]
      %v403 = vld [vmem:[%s219 + $0x18] sm:$0xff]
      %v404 = vld [vmem:[%s219 + $0x20] sm:$0xf]
      %v405 = vld [vmem:[%s219 + $0x24] sm:$0xff]
      %v406 = vld [vmem:[%s219 + $0x2c] sm:$0xf]
      %v415 = vunpack.c.l.b16 %v399
      %v416 = vunpack.c.h.b16 %v399
      %v417 = vunpack.c.l.b16 %v400
      %v418 = vunpack.c.l.b16 %v401
      %v419 = vunpack.c.h.b16 %v401
      %v420 = vunpack.c.l.b16 %v402
      %v421 = vunpack.c.l.b16 %v403
      %v422 = vunpack.c.h.b16 %v403
      %v423 = vunpack.c.l.b16 %v404
      %v424 = vunpack.c.l.b16 %v405
      %v425 = vunpack.c.h.b16 %v405
      %v426 = vunpack.c.l.b16 %v406
      %v427 = vpack.c.b16 %v418, %v415
      %v428 = vpack.c.b16 %v419, %v416
      %v429 = vpack.c.b16 %v420, %v417
      %v430 = vpack.c.b16 %v424, %v421
      %v431 = vpack.c.b16 %v425, %v422
      %v432 = vpack.c.b16 %v426, %v423
      %433 = vrot.lane.b32.xlu0 %v427, 110
      %v434 = vpop.permute.xlu0 %433
      %435 = vrot.lane.b32.xlu0 %v428, 110
      %v436 = vpop.permute.xlu0 %435
      %437 = vrot.lane.b32.xlu0 %v429, 110
      %v438 = vpop.permute.xlu0 %437
      %439 = vrot.lane.b32.xlu0 %v430, 110
      %v440 = vpop.permute.xlu0 %439
      %441 = vrot.lane.b32.xlu0 %v431, 110
      %v442 = vpop.permute.xlu0 %441
      %443 = vrot.lane.b32.xlu0 %v432, 110
      %v444 = vpop.permute.xlu0 %443
      %vm445 = vcmask 900096
      %v446 = vsel %vm445, %v434, %v436
      %v447 = vsel %vm445, %v436, %v438
      %v448 = vsel %vm445, %v440, %v442
      %v449 = vsel %vm445, %v442, %v444
      %456 = vst [vmem:[#allocation2 + $0x90] sm:$0xff] %v446
      %457 = vst [vmem:[#allocation2 + $0x98] sm:$0xff] %v447
      %458 = vst.msk [vmem:[#allocation2 + $0xa0] sm:$0xff] %vm268, %v438
      %459 = vst [vmem:[#allocation2 + $0xa8] sm:$0xff] %v448
      %460 = vst [vmem:[#allocation2 + $0xb0] sm:$0xff] %v449
      %461 = vst.msk [vmem:[#allocation2 + $0xb8] sm:$0xff] %vm268, %v444
      %v462 = vld [vmem:[%s219] sm:$0xff]
      %v463 = vld [vmem:[%s219 + $0x8] sm:$0xf]
      %v464 = vld [vmem:[%s219 + $0xc] sm:$0xff]
      %v465 = vld [vmem:[%s219 + $0x14] sm:$0xf]
      %v466 = vld [vmem:[%s219 + $0x18] sm:$0xff]
      %v467 = vld [vmem:[%s219 + $0x20] sm:$0xf]
      %v468 = vld [vmem:[%s219 + $0x24] sm:$0xff]
      %v469 = vld [vmem:[%s219 + $0x2c] sm:$0xf]
      %v478 = vunpack.c.l.b16 %v462
      %v479 = vunpack.c.h.b16 %v462
      %v480 = vunpack.c.l.b16 %v463
      %v481 = vunpack.c.l.b16 %v464
      %v482 = vunpack.c.h.b16 %v464
      %v483 = vunpack.c.l.b16 %v465
      %v484 = vunpack.c.l.b16 %v466
      %v485 = vunpack.c.h.b16 %v466
      %v486 = vunpack.c.l.b16 %v467
      %v487 = vunpack.c.l.b16 %v468
      %v488 = vunpack.c.h.b16 %v468
      %v489 = vunpack.c.l.b16 %v469
      %v490 = vpack.c.b16 %v481, %v478
      %v491 = vpack.c.b16 %v482, %v479
      %v492 = vpack.c.b16 %v483, %v480
      %v493 = vpack.c.b16 %v487, %v484
      %v494 = vpack.c.b16 %v488, %v485
      %v495 = vpack.c.b16 %v489, %v486
      %496 = vrot.lane.b32.xlu0 %v490, 109
      %v497 = vpop.permute.xlu0 %496
      %498 = vrot.lane.b32.xlu0 %v491, 109
      %v499 = vpop.permute.xlu0 %498
      %500 = vrot.lane.b32.xlu0 %v492, 109
      %v501 = vpop.permute.xlu0 %500
      %502 = vrot.lane.b32.xlu0 %v493, 109
      %v503 = vpop.permute.xlu0 %502
      %504 = vrot.lane.b32.xlu0 %v494, 109
      %v505 = vpop.permute.xlu0 %504
      %506 = vrot.lane.b32.xlu0 %v495, 109
      %v507 = vpop.permute.xlu0 %506
      %vm508 = vcmask 891904
      %v509 = vsel %vm508, %v497, %v499
      %v510 = vsel %vm508, %v499, %v501
      %v511 = vsel %vm508, %v503, %v505
      %v512 = vsel %vm508, %v505, %v507
      %519 = vst [vmem:[#allocation2 + $0xc0] sm:$0xff] %v509
      %520 = vst [vmem:[#allocation2 + $0xc8] sm:$0xff] %v510
      %521 = vst.msk [vmem:[#allocation2 + $0xd0] sm:$0xff] %vm268, %v501
      %522 = vst [vmem:[#allocation2 + $0xd8] sm:$0xff] %v511
      %523 = vst [vmem:[#allocation2 + $0xe0] sm:$0xff] %v512
      %524 = vst.msk [vmem:[#allocation2 + $0xe8] sm:$0xff] %vm268, %v507
      %v525 = vld [vmem:[%s219] sm:$0xff]
      %v526 = vld [vmem:[%s219 + $0x8] sm:$0xf]
      %v527 = vld [vmem:[%s219 + $0xc] sm:$0xff]
      %v528 = vld [vmem:[%s219 + $0x14] sm:$0xf]
      %v529 = vld [vmem:[%s219 + $0x18] sm:$0xff]
      %v530 = vld [vmem:[%s219 + $0x20] sm:$0xf]
      %v531 = vld [vmem:[%s219 + $0x24] sm:$0xff]
      %v532 = vld [vmem:[%s219 + $0x2c] sm:$0xf]
      %v541 = vunpack.c.l.b16 %v525
      %v542 = vunpack.c.h.b16 %v525
      %v543 = vunpack.c.l.b16 %v526
      %v544 = vunpack.c.l.b16 %v527
      %v545 = vunpack.c.h.b16 %v527
      %v546 = vunpack.c.l.b16 %v528
      %v547 = vunpack.c.l.b16 %v529
      %v548 = vunpack.c.h.b16 %v529
      %v549 = vunpack.c.l.b16 %v530
      %v550 = vunpack.c.l.b16 %v531
      %v551 = vunpack.c.h.b16 %v531
      %v552 = vunpack.c.l.b16 %v532
      %v553 = vpack.c.b16 %v544, %v541
      %v554 = vpack.c.b16 %v545, %v542
      %v555 = vpack.c.b16 %v546, %v543
      %v556 = vpack.c.b16 %v550, %v547
      %v557 = vpack.c.b16 %v551, %v548
      %v558 = vpack.c.b16 %v552, %v549
      %559 = vrot.lane.b32.xlu0 %v553, 108
      %v560 = vpop.permute.xlu0 %559
      %561 = vrot.lane.b32.xlu0 %v554, 108
      %v562 = vpop.permute.xlu0 %561
      %563 = vrot.lane.b32.xlu0 %v555, 108
      %v564 = vpop.permute.xlu0 %563
      %565 = vrot.lane.b32.xlu0 %v556, 108
      %v566 = vpop.permute.xlu0 %565
      %567 = vrot.lane.b32.xlu0 %v557, 108
      %v568 = vpop.permute.xlu0 %567
      %569 = vrot.lane.b32.xlu0 %v558, 108
      %v570 = vpop.permute.xlu0 %569
      %vm571 = vcmask 883712
      %v572 = vsel %vm571, %v560, %v562
      %v573 = vsel %vm571, %v562, %v564
      %v574 = vsel %vm571, %v566, %v568
      %v575 = vsel %vm571, %v568, %v570
      %582 = vst [vmem:[#allocation2 + $0xf0] sm:$0xff] %v572
      %583 = vst [vmem:[#allocation2 + $0xf8] sm:$0xff] %v573
      %584 = vst.msk [vmem:[#allocation2 + $0x100] sm:$0xff] %vm268, %v564
      %585 = vst [vmem:[#allocation2 + $0x108] sm:$0xff] %v574
      %586 = vst [vmem:[#allocation2 + $0x110] sm:$0xff] %v575
      %587 = vst.msk [vmem:[#allocation2 + $0x118] sm:$0xff] %vm268, %v570
      %v588 = vld [vmem:[%s219] sm:$0xff]
      %v589 = vld [vmem:[%s219 + $0x8] sm:$0xf]
      %v590 = vld [vmem:[%s219 + $0xc] sm:$0xff]
      %v591 = vld [vmem:[%s219 + $0x14] sm:$0xf]
      %v592 = vld [vmem:[%s219 + $0x18] sm:$0xff]
      %v593 = vld [vmem:[%s219 + $0x20] sm:$0xf]
      %v594 = vld [vmem:[%s219 + $0x24] sm:$0xff]
      %v595 = vld [vmem:[%s219 + $0x2c] sm:$0xf]
      %v604 = vunpack.c.l.b16 %v588
      %v605 = vunpack.c.h.b16 %v588
      %v606 = vunpack.c.l.b16 %v589
      %v607 = vunpack.c.l.b16 %v590
      %v608 = vunpack.c.h.b16 %v590
      %v609 = vunpack.c.l.b16 %v591
      %v610 = vunpack.c.l.b16 %v592
      %v611 = vunpack.c.h.b16 %v592
      %v612 = vunpack.c.l.b16 %v593
      %v613 = vunpack.c.l.b16 %v594
      %v614 = vunpack.c.h.b16 %v594
      %v615 = vunpack.c.l.b16 %v595
      %v616 = vpack.c.b16 %v607, %v604
      %v617 = vpack.c.b16 %v608, %v605
      %v618 = vpack.c.b16 %v609, %v606
      %v619 = vpack.c.b16 %v613, %v610
      %v620 = vpack.c.b16 %v614, %v611
      %v621 = vpack.c.b16 %v615, %v612
      %622 = vrot.lane.b32.xlu0 %v616, 92
      %v623 = vpop.permute.xlu0 %622
      %624 = vrot.lane.b32.xlu0 %v617, 92
      %v625 = vpop.permute.xlu0 %624
      %626 = vrot.lane.b32.xlu0 %v618, 92
      %v627 = vpop.permute.xlu0 %626
      %628 = vrot.lane.b32.xlu0 %v619, 92
      %v629 = vpop.permute.xlu0 %628
      %630 = vrot.lane.b32.xlu0 %v620, 92
      %v631 = vpop.permute.xlu0 %630
      %632 = vrot.lane.b32.xlu0 %v621, 92
      %v633 = vpop.permute.xlu0 %632
      %vm634 = vcmask 752640
      %v635 = vsel %vm634, %v623, %v625
      %v636 = vsel %vm634, %v625, %v627
      %v637 = vsel %vm634, %v629, %v631
      %v638 = vsel %vm634, %v631, %v633
      %645 = vst [vmem:[#allocation2 + $0x120] sm:$0xff] %v635
      %646 = vst [vmem:[#allocation2 + $0x128] sm:$0xff] %v636
      %647 = vst.msk [vmem:[#allocation2 + $0x130] sm:$0xff] %vm268, %v627
      %648 = vst [vmem:[#allocation2 + $0x138] sm:$0xff] %v637
      %649 = vst [vmem:[#allocation2 + $0x140] sm:$0xff] %v638
      %650 = vst.msk [vmem:[#allocation2 + $0x148] sm:$0xff] %vm268, %v633
      %v651 = vld [vmem:[%s219] sm:$0xff]
      %v652 = vld [vmem:[%s219 + $0x8] sm:$0xf]
      %v653 = vld [vmem:[%s219 + $0xc] sm:$0xff]
      %v654 = vld [vmem:[%s219 + $0x14] sm:$0xf]
      %v655 = vld [vmem:[%s219 + $0x18] sm:$0xff]
      %v656 = vld [vmem:[%s219 + $0x20] sm:$0xf]
      %v657 = vld [vmem:[%s219 + $0x24] sm:$0xff]
      %v658 = vld [vmem:[%s219 + $0x2c] sm:$0xf]
      %v667 = vunpack.c.l.b16 %v651
      %v668 = vunpack.c.h.b16 %v651
      %v669 = vunpack.c.l.b16 %v652
      %v670 = vunpack.c.l.b16 %v653
      %v671 = vunpack.c.h.b16 %v653
      %v672 = vunpack.c.l.b16 %v654
      %v673 = vunpack.c.l.b16 %v655
      %v674 = vunpack.c.h.b16 %v655
      %v675 = vunpack.c.l.b16 %v656
      %v676 = vunpack.c.l.b16 %v657
      %v677 = vunpack.c.h.b16 %v657
      %v678 = vunpack.c.l.b16 %v658
      %v679 = vpack.c.b16 %v670, %v667
      %v680 = vpack.c.b16 %v671, %v668
      %v681 = vpack.c.b16 %v672, %v669
      %v682 = vpack.c.b16 %v676, %v673
      %v683 = vpack.c.b16 %v677, %v674
      %v684 = vpack.c.b16 %v678, %v675
      %685 = vrot.lane.b32.xlu0 %v679, 91
      %v686 = vpop.permute.xlu0 %685
      %687 = vrot.lane.b32.xlu0 %v680, 91
      %v688 = vpop.permute.xlu0 %687
      %689 = vrot.lane.b32.xlu0 %v681, 91
      %v690 = vpop.permute.xlu0 %689
      %691 = vrot.lane.b32.xlu0 %v682, 91
      %v692 = vpop.permute.xlu0 %691
      %693 = vrot.lane.b32.xlu0 %v683, 91
      %v694 = vpop.permute.xlu0 %693
      %695 = vrot.lane.b32.xlu0 %v684, 91
      %v696 = vpop.permute.xlu0 %695
      %vm697 = vcmask 744448
      %v698 = vsel %vm697, %v686, %v688
      %v699 = vsel %vm697, %v688, %v690
      %v700 = vsel %vm697, %v692, %v694
      %v701 = vsel %vm697, %v694, %v696
      %708 = vst [vmem:[#allocation2 + $0x150] sm:$0xff] %v698
      %709 = vst [vmem:[#allocation2 + $0x158] sm:$0xff] %v699
      %710 = vst.msk [vmem:[#allocation2 + $0x160] sm:$0xff] %vm268, %v690
      %711 = vst [vmem:[#allocation2 + $0x168] sm:$0xff] %v700
      %712 = vst [vmem:[#allocation2 + $0x170] sm:$0xff] %v701
      %713 = vst.msk [vmem:[#allocation2 + $0x178] sm:$0xff] %vm268, %v696
      %v714 = vld [vmem:[%s219] sm:$0xff]
      %v715 = vld [vmem:[%s219 + $0x8] sm:$0xf]
      %v716 = vld [vmem:[%s219 + $0xc] sm:$0xff]
      %v717 = vld [vmem:[%s219 + $0x14] sm:$0xf]
      %v718 = vld [vmem:[%s219 + $0x18] sm:$0xff]
      %v719 = vld [vmem:[%s219 + $0x20] sm:$0xf]
      %v720 = vld [vmem:[%s219 + $0x24] sm:$0xff]
      %v721 = vld [vmem:[%s219 + $0x2c] sm:$0xf]
      %v730 = vunpack.c.l.b16 %v714
      %v731 = vunpack.c.h.b16 %v714
      %v732 = vunpack.c.l.b16 %v715
      %v733 = vunpack.c.l.b16 %v716
      %v734 = vunpack.c.h.b16 %v716
      %v735 = vunpack.c.l.b16 %v717
      %v736 = vunpack.c.l.b16 %v718
      %v737 = vunpack.c.h.b16 %v718
      %v738 = vunpack.c.l.b16 %v719
      %v739 = vunpack.c.l.b16 %v720
      %v740 = vunpack.c.h.b16 %v720
      %v741 = vunpack.c.l.b16 %v721
      %v742 = vpack.c.b16 %v733, %v730
      %v743 = vpack.c.b16 %v734, %v731
      %v744 = vpack.c.b16 %v735, %v732
      %v745 = vpack.c.b16 %v739, %v736
      %v746 = vpack.c.b16 %v740, %v737
      %v747 = vpack.c.b16 %v741, %v738
      %748 = vrot.lane.b32.xlu0 %v742, 90
      %v749 = vpop.permute.xlu0 %748
      %750 = vrot.lane.b32.xlu0 %v743, 90
      %v751 = vpop.permute.xlu0 %750
      %752 = vrot.lane.b32.xlu0 %v744, 90
      %v753 = vpop.permute.xlu0 %752
      %754 = vrot.lane.b32.xlu0 %v745, 90
      %v755 = vpop.permute.xlu0 %754
      %756 = vrot.lane.b32.xlu0 %v746, 90
      %v757 = vpop.permute.xlu0 %756
      %758 = vrot.lane.b32.xlu0 %v747, 90
      %v759 = vpop.permute.xlu0 %758
      %vm760 = vcmask 736256
      %v761 = vsel %vm760, %v749, %v751
      %v762 = vsel %vm760, %v751, %v753
      %v763 = vsel %vm760, %v755, %v757
      %v764 = vsel %vm760, %v757, %v759
      %771 = vst [vmem:[#allocation2 + $0x180] sm:$0xff] %v761
      %772 = vst [vmem:[#allocation2 + $0x188] sm:$0xff] %v762
      %773 = vst.msk [vmem:[#allocation2 + $0x190] sm:$0xff] %vm268, %v753
      %774 = vst [vmem:[#allocation2 + $0x198] sm:$0xff] %v763
      %775 = vst [vmem:[#allocation2 + $0x1a0] sm:$0xff] %v764
      %776 = vst.msk [vmem:[#allocation2 + $0x1a8] sm:$0xff] %vm268, %v759
      %v777 = vld [vmem:[#allocation2] sm:$0xff]
      %v778 = vld [vmem:[#allocation2 + $0x8] sm:$0xff]
      %v779 = vld [vmem:[#allocation2 + $0x10] sm:$0xff]
      %v780 = vld [vmem:[#allocation2 + $0x18] sm:$0xff]
      %v781 = vld [vmem:[#allocation2 + $0x20] sm:$0xff]
      %v782 = vld [vmem:[#allocation2 + $0x28] sm:$0xff]
      %v783 = vld [vmem:[#allocation2 + $0x30] sm:$0xff]
      %v784 = vld [vmem:[#allocation2 + $0x38] sm:$0xff]
      %v785 = vld [vmem:[#allocation2 + $0x40] sm:$0xff]
      %v786 = vld [vmem:[#allocation2 + $0x48] sm:$0xff]
      %v787 = vld [vmem:[#allocation2 + $0x50] sm:$0xff]
      %v788 = vld [vmem:[#allocation2 + $0x58] sm:$0xff]
      %v789 = vld [vmem:[#allocation2 + $0x60] sm:$0xff]
      %v790 = vld [vmem:[#allocation2 + $0x68] sm:$0xff]
      %v791 = vld [vmem:[#allocation2 + $0x70] sm:$0xff]
      %v792 = vld [vmem:[#allocation2 + $0x78] sm:$0xff]
      %v793 = vld [vmem:[#allocation2 + $0x80] sm:$0xff]
      %v794 = vld [vmem:[#allocation2 + $0x88] sm:$0xff]
      %v795 = vld [vmem:[#allocation2 + $0x90] sm:$0xff]
      %v796 = vld [vmem:[#allocation2 + $0x98] sm:$0xff]
      %v797 = vld [vmem:[#allocation2 + $0xa0] sm:$0xff]
      %v798 = vld [vmem:[#allocation2 + $0xa8] sm:$0xff]
      %v799 = vld [vmem:[#allocation2 + $0xb0] sm:$0xff]
      %v800 = vld [vmem:[#allocation2 + $0xb8] sm:$0xff]
      %v801 = vld [vmem:[#allocation2 + $0xc0] sm:$0xff]
      %v802 = vld [vmem:[#allocation2 + $0xc8] sm:$0xff]
      %v803 = vld [vmem:[#allocation2 + $0xd0] sm:$0xff]
      %v804 = vld [vmem:[#allocation2 + $0xd8] sm:$0xff]
      %v805 = vld [vmem:[#allocation2 + $0xe0] sm:$0xff]
      %v806 = vld [vmem:[#allocation2 + $0xe8] sm:$0xff]
      %v807 = vld [vmem:[#allocation2 + $0xf0] sm:$0xff]
      %v808 = vld [vmem:[#allocation2 + $0xf8] sm:$0xff]
      %v809 = vld [vmem:[#allocation2 + $0x100] sm:$0xff]
      %v810 = vld [vmem:[#allocation2 + $0x108] sm:$0xff]
      %v811 = vld [vmem:[#allocation2 + $0x110] sm:$0xff]
      %v812 = vld [vmem:[#allocation2 + $0x118] sm:$0xff]
      %v813 = vld [vmem:[#allocation2 + $0x120] sm:$0xff]
      %v814 = vld [vmem:[#allocation2 + $0x128] sm:$0xff]
      %v815 = vld [vmem:[#allocation2 + $0x130] sm:$0xff]
      %v816 = vld [vmem:[#allocation2 + $0x138] sm:$0xff]
      %v817 = vld [vmem:[#allocation2 + $0x140] sm:$0xff]
      %v818 = vld [vmem:[#allocation2 + $0x148] sm:$0xff]
      %v819 = vld [vmem:[#allocation2 + $0x150] sm:$0xff]
      %v820 = vld [vmem:[#allocation2 + $0x158] sm:$0xff]
      %v821 = vld [vmem:[#allocation2 + $0x160] sm:$0xff]
      %v822 = vld [vmem:[#allocation2 + $0x168] sm:$0xff]
      %v823 = vld [vmem:[#allocation2 + $0x170] sm:$0xff]
      %v824 = vld [vmem:[#allocation2 + $0x178] sm:$0xff]
      %v825 = vld [vmem:[#allocation2 + $0x180] sm:$0xff]
      %v826 = vld [vmem:[#allocation2 + $0x188] sm:$0xff]
      %v827 = vld [vmem:[#allocation2 + $0x190] sm:$0xff]
      %v828 = vld [vmem:[#allocation2 + $0x198] sm:$0xff]
      %v829 = vld [vmem:[#allocation2 + $0x1a0] sm:$0xff]
      %v830 = vld [vmem:[#allocation2 + $0x1a8] sm:$0xff]
      %v831 = vld [vmem:[%s1] sm:$0xff]
      %v832 = vld [vmem:[%s1 + $0x8] sm:$0xf]
      %v833 = vld [vmem:[%s1 + $0xc] sm:$0xff]
      %v834 = vld [vmem:[%s1 + $0x14] sm:$0xf]
      %v835 = vld [vmem:[%s1 + $0x18] sm:$0xff]
      %v836 = vld [vmem:[%s1 + $0x20] sm:$0xf]
      %v837 = vld [vmem:[%s1 + $0x24] sm:$0xff]
      %v838 = vld [vmem:[%s1 + $0x2c] sm:$0xf]
      %v839 = vld [vmem:[%s2] sm:$0xff]
      %v840 = vld [vmem:[%s2 + $0x8] sm:$0xff]
      %v841 = vld [vmem:[%s2 + $0x10] sm:$0xff]
      %v842 = vld [vmem:[%s2 + $0x18] sm:$0xff]
      %844 = vset.pattern.permute.xlu0 0
      %845 = vperm.xlu0 %844, %v839
      %v846 = vpop.permute.xlu0 %845
      %849 = vset.pattern.permute.xlu0 0
      %850 = vperm.xlu0 %849, %v840
      %v851 = vpop.permute.xlu0 %850
      %854 = vset.pattern.permute.xlu0 0
      %855 = vperm.xlu0 %854, %v841
      %v856 = vpop.permute.xlu0 %855
      %859 = vset.pattern.permute.xlu0 0
      %860 = vperm.xlu0 %859, %v842
      %v861 = vpop.permute.xlu0 %860
      %v871 = vunpack.c.l.b16 %v831
      %v872 = vunpack.c.h.b16 %v831
      %v873 = vunpack.c.l.b16 %v832
      %v874 = vunpack.c.l.b16 %v833
      %v875 = vunpack.c.h.b16 %v833
      %v876 = vunpack.c.l.b16 %v834
      %v877 = vunpack.c.l.b16 %v835
      %v878 = vunpack.c.h.b16 %v835
      %v879 = vunpack.c.l.b16 %v836
      %v880 = vunpack.c.l.b16 %v837
      %v881 = vunpack.c.h.b16 %v837
      %v882 = vunpack.c.l.b16 %v838
      %v883 = vpack.c.b16 %v874, %v871
      %v884 = vpack.c.b16 %v875, %v872
      %v885 = vpack.c.b16 %v876, %v873
      %v886 = vpack.c.b16 %v880, %v877
      %v887 = vpack.c.b16 %v881, %v878
      %v888 = vpack.c.b16 %v882, %v879
      %v894 = vsel %vm268, %v885, 0
      %v897 = vsel %vm268, %v888, 0
      %899 = vmatprep.subr.bf16.mxu0 %v778
      %900 = vmatpush1.bf16.msra.mxu0 %v777
      %901 = vmatprep.subr.bf16.mxu0 %v781
      %902 = vmatpush1.bf16.msra.mxu0 %v780
      %903 = vmatprep.subr.bf16.mxu0 %v784
      %904 = vmatpush1.bf16.msra.mxu0 %v783
      %905 = vmatprep.subr.bf16.mxu0 %v787
      %906 = vmatpush1.bf16.msra.mxu0 %v786
      %907 = vmatprep.subr.bf16.mxu0 %v790
      %908 = vmatpush1.bf16.msra.mxu0 %v789
      %909 = vmatprep.subr.bf16.mxu0 %v793
      %910 = vmatpush1.bf16.msra.mxu0 %v792
      %911 = vmatprep.subr.bf16.mxu0 %v796
      %912 = vmatpush1.bf16.msra.mxu0 %v795
      %913 = vmatprep.subr.bf16.mxu0 %v799
      %914 = vmatpush1.bf16.msra.mxu0 %v798
      %915 = vmatprep.subr.bf16.mxu0 %v802
      %916 = vmatpush1.bf16.msra.mxu0 %v801
      %917 = vmatprep.subr.bf16.mxu0 %v805
      %918 = vmatpush1.bf16.msra.mxu0 %v804
      %919 = vmatprep.subr.bf16.mxu0 %v808
      %920 = vmatpush1.bf16.msra.mxu0 %v807
      %921 = vmatprep.subr.bf16.mxu0 %v811
      %922 = vmatpush1.bf16.msra.mxu0 %v810
      %923 = vmatprep.subr.bf16.mxu0 %v814
      %924 = vmatpush1.bf16.msra.mxu0 %v813
      %925 = vmatprep.subr.bf16.mxu0 %v817
      %926 = vmatpush1.bf16.msra.mxu0 %v816
      %927 = vmatprep.subr.bf16.mxu0 %v820
      %928 = vmatpush1.bf16.msra.mxu0 %v819
      %929 = vmatprep.subr.bf16.mxu0 %v823
      %930 = vmatpush1.bf16.msra.mxu0 %v822
      %931 = vmatprep.mubr.bf16.mxu0 %v884
      %932 = vmatmul.mubr.bf16.gmra.mrb[0].mxu0 %v883
      %v933 = vpop.f32.mrb[0].mxu0
      %v934 = vadd.f32 %v846, %v933
      %v935 = vpop.f32.mrb[0].mxu0
      %v936 = vadd.f32 %v846, %v935
      %v937 = vpop.f32.mrb[0].mxu0
      %v938 = vadd.f32 %v851, %v937
      %v939 = vpop.f32.mrb[0].mxu0
      %v940 = vadd.f32 %v851, %v939
      %941 = vmatprep.mubr.bf16.mxu0 %v887
      %942 = vmatmul.mubr.bf16.gmra.mrb[0].mxu0 %v886
      %v943 = vpop.f32.mrb[0].mxu0
      %v944 = vadd.f32 %v856, %v943
      %v945 = vpop.f32.mrb[0].mxu0
      %v946 = vadd.f32 %v856, %v945
      %v947 = vpop.f32.mrb[0].mxu0
      %v948 = vadd.f32 %v861, %v947
      %v949 = vpop.f32.mrb[0].mxu0
      %v950 = vadd.f32 %v861, %v949
      %951 = vdwg.mxu0
      %952 = vmatprep.subr.bf16.mxu0 %v826
      %953 = vmatpush1.bf16.msra.mxu0 %v825
      %954 = vmatprep.subr.bf16.mxu0 %v829
      %955 = vmatpush1.bf16.msra.mxu0 %v828
      %956 = vmatprep.subr.bf16.mxu0 0
      %957 = vmatpush1.bf16.msra.mxu0 0
      %958 = vmatprep.subr.bf16.mxu0 0
      %959 = vmatpush1.bf16.msra.mxu0 0
      %960 = vmatprep.subr.bf16.mxu0 0
      %961 = vmatpush1.bf16.msra.mxu0 0
      %962 = vmatprep.subr.bf16.mxu0 0
      %963 = vmatpush1.bf16.msra.mxu0 0
      %964 = vmatprep.subr.bf16.mxu0 0
      %965 = vmatpush1.bf16.msra.mxu0 0
      %966 = vmatprep.subr.bf16.mxu0 0
      %967 = vmatpush1.bf16.msra.mxu0 0
      %968 = vmatprep.subr.bf16.mxu0 0
      %969 = vmatpush1.bf16.msra.mxu0 0
      %970 = vmatprep.subr.bf16.mxu0 0
      %971 = vmatpush1.bf16.msra.mxu0 0
      %972 = vmatprep.subr.bf16.mxu0 0
      %973 = vmatpush1.bf16.msra.mxu0 0
      %974 = vmatprep.subr.bf16.mxu0 0
      %975 = vmatpush1.bf16.msra.mxu0 0
      %976 = vmatprep.subr.bf16.mxu0 0
      %977 = vmatpush1.bf16.msra.mxu0 0
      %978 = vmatprep.subr.bf16.mxu0 0
      %979 = vmatpush1.bf16.msra.mxu0 0
      %980 = vmatprep.subr.bf16.mxu0 0
      %981 = vmatpush1.bf16.msra.mxu0 0
      %982 = vmatprep.subr.bf16.mxu0 0
      %983 = vmatpush1.bf16.msra.mxu0 0
      %984 = vmatprep.mubr.bf16.mxu0 0
      %985 = vmatmul.mubr.bf16.gmra.mrb[0].mxu0 %v894
      %v986 = vpop.f32.mrb[0].mxu0
      %v987 = vadd.f32 %v934, %v986
      %v988 = vpop.f32.mrb[0].mxu0
      %v989 = vadd.f32 %v936, %v988
      %v990 = vpop.f32.mrb[0].mxu0
      %v991 = vadd.f32 %v938, %v990
      %v992 = vpop.f32.mrb[0].mxu0
      %v993 = vadd.f32 %v940, %v992
      %994 = vmatprep.mubr.bf16.mxu0 0
      %995 = vmatmul.mubr.bf16.gmra.mrb[0].mxu0 %v897
      %v996 = vpop.f32.mrb[0].mxu0
      %v997 = vadd.f32 %v944, %v996
      %v998 = vpop.f32.mrb[0].mxu0
      %v999 = vadd.f32 %v946, %v998
      %v1000 = vpop.f32.mrb[0].mxu0
      %v1001 = vadd.f32 %v948, %v1000
      %v1002 = vpop.f32.mrb[0].mxu0
      %v1003 = vadd.f32 %v950, %v1002
      %1004 = vdwg.mxu0
      %1005 = vmatprep.subr.bf16.mxu0 0
      %1006 = vmatpush1.bf16.msra.mxu0 %v779
      %1007 = vmatprep.subr.bf16.mxu0 0
      %1008 = vmatpush1.bf16.msra.mxu0 %v782
      %1009 = vmatprep.subr.bf16.mxu0 0
      %1010 = vmatpush1.bf16.msra.mxu0 %v785
      %1011 = vmatprep.subr.bf16.mxu0 0
      %1012 = vmatpush1.bf16.msra.mxu0 %v788
      %1013 = vmatprep.subr.bf16.mxu0 0
      %1014 = vmatpush1.bf16.msra.mxu0 %v791
      %1015 = vmatprep.subr.bf16.mxu0 0
      %1016 = vmatpush1.bf16.msra.mxu0 %v794
      %1017 = vmatprep.subr.bf16.mxu0 0
      %1018 = vmatpush1.bf16.msra.mxu0 %v797
      %1019 = vmatprep.subr.bf16.mxu0 0
      %1020 = vmatpush1.bf16.msra.mxu0 %v800
      %1021 = vmatprep.subr.bf16.mxu0 0
      %1022 = vmatpush1.bf16.msra.mxu0 %v803
      %1023 = vmatprep.subr.bf16.mxu0 0
      %1024 = vmatpush1.bf16.msra.mxu0 %v806
      %1025 = vmatprep.subr.bf16.mxu0 0
      %1026 = vmatpush1.bf16.msra.mxu0 %v809
      %1027 = vmatprep.subr.bf16.mxu0 0
      %1028 = vmatpush1.bf16.msra.mxu0 %v812
      %1029 = vmatprep.subr.bf16.mxu0 0
      %1030 = vmatpush1.bf16.msra.mxu0 %v815
      %1031 = vmatprep.subr.bf16.mxu0 0
      %1032 = vmatpush1.bf16.msra.mxu0 %v818
      %1033 = vmatprep.subr.bf16.mxu0 0
      %1034 = vmatpush1.bf16.msra.mxu0 %v821
      %1035 = vmatprep.subr.bf16.mxu0 0
      %1036 = vmatpush1.bf16.msra.mxu0 %v824
      %1037 = vmatprep.mubr.bf16.mxu0 %v884
      %1038 = vmatmul.mubr.bf16.gmra.mrb[0].mxu0 %v883
      %v1039 = vpop.f32.mrb[0].mxu0
      %v1040 = vadd.f32 %v846, %v1039
      %v1041 = vpop.f32.mrb[0].mxu0
      %v1042 = vpop.f32.mrb[0].mxu0
      %v1043 = vadd.f32 %v851, %v1042
      %v1044 = vpop.f32.mrb[0].mxu0
      %1045 = vmatprep.mubr.bf16.mxu0 %v887
      %1046 = vmatmul.mubr.bf16.gmra.mrb[0].mxu0 %v886
      %v1047 = vpop.f32.mrb[0].mxu0
      %v1048 = vadd.f32 %v856, %v1047
      %v1049 = vpop.f32.mrb[0].mxu0
      %v1050 = vpop.f32.mrb[0].mxu0
      %v1051 = vadd.f32 %v861, %v1050
      %v1052 = vpop.f32.mrb[0].mxu0
      %1053 = vdwg.mxu0
      %1054 = vmatprep.subr.bf16.mxu0 0
      %1055 = vmatpush1.bf16.msra.mxu0 %v827
      %1056 = vmatprep.subr.bf16.mxu0 0
      %1057 = vmatpush1.bf16.msra.mxu0 %v830
      %1058 = vmatprep.subr.bf16.mxu0 0
      %1059 = vmatpush1.bf16.msra.mxu0 0
      %1060 = vmatprep.subr.bf16.mxu0 0
      %1061 = vmatpush1.bf16.msra.mxu0 0
      %1062 = vmatprep.subr.bf16.mxu0 0
      %1063 = vmatpush1.bf16.msra.mxu0 0
      %1064 = vmatprep.subr.bf16.mxu0 0
      %1065 = vmatpush1.bf16.msra.mxu0 0
      %1066 = vmatprep.subr.bf16.mxu0 0
      %1067 = vmatpush1.bf16.msra.mxu0 0
      %1068 = vmatprep.subr.bf16.mxu0 0
      %1069 = vmatpush1.bf16.msra.mxu0 0
      %1070 = vmatprep.subr.bf16.mxu0 0
      %1071 = vmatpush1.bf16.msra.mxu0 0
      %1072 = vmatprep.subr.bf16.mxu0 0
      %1073 = vmatpush1.bf16.msra.mxu0 0
      %1074 = vmatprep.subr.bf16.mxu0 0
      %1075 = vmatpush1.bf16.msra.mxu0 0
      %1076 = vmatprep.subr.bf16.mxu0 0
      %1077 = vmatpush1.bf16.msra.mxu0 0
      %1078 = vmatprep.subr.bf16.mxu0 0
      %1079 = vmatpush1.bf16.msra.mxu0 0
      %1080 = vmatprep.subr.bf16.mxu0 0
      %1081 = vmatpush1.bf16.msra.mxu0 0
      %1082 = vmatprep.subr.bf16.mxu0 0
      %1083 = vmatpush1.bf16.msra.mxu0 0
      %1084 = vmatprep.subr.bf16.mxu0 0
      %1085 = vmatpush1.bf16.msra.mxu0 0
      %1086 = vmatprep.mubr.bf16.mxu0 0
      %1087 = vmatmul.mubr.bf16.gmra.mrb[0].mxu0 %v894
      %v1088 = vpop.f32.mrb[0].mxu0
      %v1089 = vadd.f32 %v1040, %v1088
      %v1090 = vpop.f32.mrb[0].mxu0
      %v1091 = vpop.f32.mrb[0].mxu0
      %v1092 = vadd.f32 %v1043, %v1091
      %v1093 = vpop.f32.mrb[0].mxu0
      %1094 = vmatprep.mubr.bf16.mxu0 0
      %1095 = vmatmul.mubr.bf16.gmra.mrb[0].mxu0 %v897
      %v1096 = vpop.f32.mrb[0].mxu0
      %v1097 = vadd.f32 %v1048, %v1096
      %v1098 = vpop.f32.mrb[0].mxu0
      %v1099 = vpop.f32.mrb[0].mxu0
      %v1100 = vadd.f32 %v1051, %v1099
      %v1101 = vpop.f32.mrb[0].mxu0
      %1102 = vdwg.mxu0
      %v1103 = vmax.f32 %v987, 0.0
      %v1104 = vmax.f32 %v989, 0.0
      %v1105 = vmax.f32 %v1089, 0.0
      %v1106 = vmax.f32 %v991, 0.0
      %v1107 = vmax.f32 %v993, 0.0
      %v1108 = vmax.f32 %v1092, 0.0
      %v1109 = vmax.f32 %v997, 0.0
      %v1110 = vmax.f32 %v999, 0.0
      %v1111 = vmax.f32 %v1097, 0.0
      %v1112 = vmax.f32 %v1001, 0.0
      %v1113 = vmax.f32 %v1003, 0.0
      %v1114 = vmax.f32 %v1100, 0.0
      %v1115 = vld [vmem:[%s3] sm:$0xf]
      %v1116 = vld [vmem:[%s3 + $0x4] sm:$0xf]
      %v1117 = vld [vmem:[%s3 + $0x8] sm:$0xf]
      %v1118 = vld [vmem:[%s3 + $0xc] sm:$0xf]
      %v1119 = vpack.c.bf16 %v1106, %v1103
      %v1120 = vpack.c.bf16 %v1107, %v1104
      %v1121 = vpack.c.bf16 %v1108, %v1105
      %v1122 = vpack.c.bf16 %v1112, %v1109
      %v1123 = vpack.c.bf16 %v1113, %v1110
      %v1124 = vpack.c.bf16 %v1114, %v1111
      %v1125 = vunpack.c.l.bf16 %v801
      %v1126 = vunpack.c.l.bf16 %v802
      %v1127 = vunpack.c.l.bf16 %v803
      %v1128 = vunpack.c.h.bf16 %v801
      %v1129 = vunpack.c.h.bf16 %v802
      %v1130 = vunpack.c.h.bf16 %v803
      %v1131 = vunpack.c.l.bf16 %v804
      %v1132 = vunpack.c.l.bf16 %v805
      %v1133 = vunpack.c.l.bf16 %v806
      %v1134 = vunpack.c.h.bf16 %v804
      %v1135 = vunpack.c.h.bf16 %v805
      %v1136 = vunpack.c.h.bf16 %v806
      %v1137 = vld [vmem:[%s4] sm:$0xff]
      %v1138 = vld [vmem:[%s4 + $0x8] sm:$0xff]
      %v1139 = vld [vmem:[%s4 + $0x10] sm:$0xff]
      %v1140 = vld [vmem:[%s4 + $0x18] sm:$0xff]
      %1142 = vset.pattern.permute.xlu0 0
      %1143 = vperm.xlu0 %1142, %v1137
      %v1144 = vpop.permute.xlu0 %1143
      %1147 = vset.pattern.permute.xlu0 0
      %1148 = vperm.xlu0 %1147, %v1138
      %v1149 = vpop.permute.xlu0 %1148
      %1152 = vset.pattern.permute.xlu0 0
      %1153 = vperm.xlu0 %1152, %v1139
      %v1154 = vpop.permute.xlu0 %1153
      %1157 = vset.pattern.permute.xlu0 0
      %1158 = vperm.xlu0 %1157, %v1140
      %v1159 = vpop.permute.xlu0 %1158
      %v1165 = vunpack.c.l.b16 %v1115
      %v1166 = vunpack.c.l.b16 %v1116
      %v1167 = vunpack.c.l.b16 %v1117
      %v1168 = vunpack.c.l.b16 %v1118
      %v1169 = vpack.c.b16 %v1166, %v1165
      %v1170 = vpack.c.b16 %v1168, %v1167
      %v1172 = vsel %vm268, %v1169, 0
      %v1175 = vsel %vm268, %v1170, 0
      %1177 = vmatprep.subr.bf16.mxu0 %v1120
      %1178 = vmatpush1.bf16.msra.mxu0 %v1119
      %1179 = vmatprep.subr.bf16.mxu0 %v1123
      %1180 = vmatpush1.bf16.msra.mxu0 %v1122
      %1181 = vmatprep.subr.bf16.mxu0 0
      %1182 = vmatpush1.bf16.msra.mxu0 0
      %1183 = vmatprep.subr.bf16.mxu0 0
      %1184 = vmatpush1.bf16.msra.mxu0 0
      %1185 = vmatprep.subr.bf16.mxu0 0
      %1186 = vmatpush1.bf16.msra.mxu0 0
      %1187 = vmatprep.subr.bf16.mxu0 0
      %1188 = vmatpush1.bf16.msra.mxu0 0
      %1189 = vmatprep.subr.bf16.mxu0 0
      %1190 = vmatpush1.bf16.msra.mxu0 0
      %1191 = vmatprep.subr.bf16.mxu0 0
      %1192 = vmatpush1.bf16.msra.mxu0 0
      %1193 = vmatprep.subr.bf16.mxu0 0
      %1194 = vmatpush1.bf16.msra.mxu0 0
      %1195 = vmatprep.subr.bf16.mxu0 0
      %1196 = vmatpush1.bf16.msra.mxu0 0
      %1197 = vmatprep.subr.bf16.mxu0 0
      %1198 = vmatpush1.bf16.msra.mxu0 0
      %1199 = vmatprep.subr.bf16.mxu0 0
      %1200 = vmatpush1.bf16.msra.mxu0 0
      %1201 = vmatprep.subr.bf16.mxu0 0
      %1202 = vmatpush1.bf16.msra.mxu0 0
      %1203 = vmatprep.subr.bf16.mxu0 0
      %1204 = vmatpush1.bf16.msra.mxu0 0
      %1205 = vmatprep.subr.bf16.mxu0 0
      %1206 = vmatpush1.bf16.msra.mxu0 0
      %1207 = vmatprep.subr.bf16.mxu0 0
      %1208 = vmatpush1.bf16.msra.mxu0 0
      %1209 = vmatprep.mubr.bf16.mxu0 0
      %1210 = vmatmul.mubr.bf16.gmra.mrb[0].mxu0 %v1172
      %v1211 = vpop.f32.mrb[0].mxu0
      %v1212 = vadd.f32 %v1144, %v1211
      %v1213 = vpop.f32.mrb[0].mxu0
      %v1214 = vadd.f32 %v1144, %v1213
      %v1215 = vpop.f32.mrb[0].mxu0
      %v1216 = vadd.f32 %v1149, %v1215
      %v1217 = vpop.f32.mrb[0].mxu0
      %v1218 = vadd.f32 %v1149, %v1217
      %1219 = vmatprep.mubr.bf16.mxu0 0
      %1220 = vmatmul.mubr.bf16.gmra.mrb[0].mxu0 %v1175
      %v1221 = vpop.f32.mrb[0].mxu0
      %v1222 = vadd.f32 %v1154, %v1221
      %v1223 = vpop.f32.mrb[0].mxu0
      %v1224 = vadd.f32 %v1154, %v1223
      %v1225 = vpop.f32.mrb[0].mxu0
      %v1226 = vadd.f32 %v1159, %v1225
      %v1227 = vpop.f32.mrb[0].mxu0
      %v1228 = vadd.f32 %v1159, %v1227
      %1229 = vdwg.mxu0
      %1230 = vmatprep.subr.bf16.mxu0 0
      %1231 = vmatpush1.bf16.msra.mxu0 %v1121
      %1232 = vmatprep.subr.bf16.mxu0 0
      %1233 = vmatpush1.bf16.msra.mxu0 %v1124
      %1234 = vmatprep.subr.bf16.mxu0 0
      %1235 = vmatpush1.bf16.msra.mxu0 0
      %1236 = vmatprep.subr.bf16.mxu0 0
      %1237 = vmatpush1.bf16.msra.mxu0 0
      %1238 = vmatprep.subr.bf16.mxu0 0
      %1239 = vmatpush1.bf16.msra.mxu0 0
      %1240 = vmatprep.subr.bf16.mxu0 0
      %1241 = vmatpush1.bf16.msra.mxu0 0
      %1242 = vmatprep.subr.bf16.mxu0 0
      %1243 = vmatpush1.bf16.msra.mxu0 0
      %1244 = vmatprep.subr.bf16.mxu0 0
      %1245 = vmatpush1.bf16.msra.mxu0 0
      %1246 = vmatprep.subr.bf16.mxu0 0
      %1247 = vmatpush1.bf16.msra.mxu0 0
      %1248 = vmatprep.subr.bf16.mxu0 0
      %1249 = vmatpush1.bf16.msra.mxu0 0
      %1250 = vmatprep.subr.bf16.mxu0 0
      %1251 = vmatpush1.bf16.msra.mxu0 0
      %1252 = vmatprep.subr.bf16.mxu0 0
      %1253 = vmatpush1.bf16.msra.mxu0 0
      %1254 = vmatprep.subr.bf16.mxu0 0
      %1255 = vmatpush1.bf16.msra.mxu0 0
      %1256 = vmatprep.subr.bf16.mxu0 0
      %1257 = vmatpush1.bf16.msra.mxu0 0
      %1258 = vmatprep.subr.bf16.mxu0 0
      %1259 = vmatpush1.bf16.msra.mxu0 0
      %1260 = vmatprep.subr.bf16.mxu0 0
      %1261 = vmatpush1.bf16.msra.mxu0 0
      %1262 = vmatprep.mubr.bf16.mxu0 0
      %1263 = vmatmul.mubr.bf16.gmra.mrb[0].mxu0 %v1172
      %v1264 = vpop.f32.mrb[0].mxu0
      %v1265 = vadd.f32 %v1144, %v1264
      %v1266 = vpop.f32.mrb[0].mxu0
      %v1267 = vpop.f32.mrb[0].mxu0
      %v1268 = vadd.f32 %v1149, %v1267
      %v1269 = vpop.f32.mrb[0].mxu0
      %1270 = vmatprep.mubr.bf16.mxu0 0
      %1271 = vmatmul.mubr.bf16.gmra.mrb[0].mxu0 %v1175
      %v1272 = vpop.f32.mrb[0].mxu0
      %v1273 = vadd.f32 %v1154, %v1272
      %v1274 = vpop.f32.mrb[0].mxu0
      %v1275 = vpop.f32.mrb[0].mxu0
      %v1276 = vadd.f32 %v1159, %v1275
      %v1277 = vpop.f32.mrb[0].mxu0
      %1278 = vdwg.mxu0
      %v1279 = vadd.f32 %v1212, %v1125
      %v1280 = vadd.f32 %v1214, %v1126
      %v1281 = vadd.f32 %v1265, %v1127
      %v1282 = vadd.f32 %v1216, %v1128
      %v1283 = vadd.f32 %v1218, %v1129
      %v1284 = vadd.f32 %v1268, %v1130
      %v1285 = vadd.f32 %v1222, %v1131
      %v1286 = vadd.f32 %v1224, %v1132
      %v1287 = vadd.f32 %v1273, %v1133
      %v1288 = vadd.f32 %v1226, %v1134
      %v1289 = vadd.f32 %v1228, %v1135
      %v1290 = vadd.f32 %v1276, %v1136
      %v1291 = vmax.f32 %v1279, 0.0
      %v1292 = vmax.f32 %v1280, 0.0
      %v1293 = vmax.f32 %v1281, 0.0
      %v1294 = vmax.f32 %v1282, 0.0
      %v1295 = vmax.f32 %v1283, 0.0
      %v1296 = vmax.f32 %v1284, 0.0
      %v1297 = vmax.f32 %v1285, 0.0
      %v1298 = vmax.f32 %v1286, 0.0
      %v1299 = vmax.f32 %v1287, 0.0
      %v1300 = vmax.f32 %v1288, 0.0
      %v1301 = vmax.f32 %v1289, 0.0
      %v1302 = vmax.f32 %v1290, 0.0
      %1303 = vst [vmem:[%s224] sm:$0xff] %v1291
      %1304 = vst [vmem:[%s224 + $0x8] sm:$0xff] %v1292
      %1305 = vst.msk [vmem:[%s224 + $0x10] sm:$0xff] %vm268, %v1293
      %1306 = vst [vmem:[%s224 + $0x18] sm:$0xff] %v1294
      %1307 = vst [vmem:[%s224 + $0x20] sm:$0xff] %v1295
      %1308 = vst.msk [vmem:[%s224 + $0x28] sm:$0xff] %vm268, %v1296
      %1309 = vst [vmem:[%s224 + $0x30] sm:$0xff] %v1297
      %1310 = vst [vmem:[%s224 + $0x38] sm:$0xff] %v1298
      %1311 = vst.msk [vmem:[%s224 + $0x40] sm:$0xff] %vm268, %v1299
      %1312 = vst [vmem:[%s224 + $0x48] sm:$0xff] %v1300
      %1313 = vst [vmem:[%s224 + $0x50] sm:$0xff] %v1301
      %1314 = vst.msk [vmem:[%s224 + $0x58] sm:$0xff] %vm268, %v1302
      %p1315 = scmp.lt.s32.totalorder %s16, 1
      %s1316 = scalar_select %p1315, %s16, 1
      %s1317 = smul.addr %s1316, 12
      %s1318 = smul.addr %s1317, 8
      %s1319 = scalar_lea.vmem %s5, %s1318
      // Predicated region
      $region41: #{residual_block.1} parent=39 // pred_check
        %p1320 = pneg %p144
      $region42: #{residual_block.1} parent=39 // pred_check_branch
        %1322 = sbr.rel (%p1320) target = $region44
      $region43: #{residual_block.1} parent=39 // pred_region
        _
      $region44: #{residual_block.1} parent=39 // pred_fallthru
        _
    $region40: #{residual_block.1} parent=5 // pred_fallthru
      _
    %p1323 = scmp.le.s32.totalorder 2, %s11
    // Predicated region
    $region45: #{residual_block.1} parent=5 // pred_check
      %p1324 = pneg %p1323
    $region46: #{residual_block.1} parent=5 // pred_check_branch
      %1326 = sbr.rel (%p1324) target = $region48
    $region47: #{residual_block.1} parent=5 // pred_region
      %s1327 = ssub.s32 %s11, 2
      // Predicated region
      $region49: #{residual_block.1} parent=47 // pred_check
        %p1328 = pneg %p150
      $region50: #{residual_block.1} parent=47 // pred_check_branch
        %1330 = sbr.rel (%p1328) target = $region52
      $region51: #{residual_block.1} parent=47 // pred_region
        %p1331 = scmp.lt.s32.totalorder %s17, 1
        %s1332 = scalar_select %p1331, %s17, 1
        %s1333 = smul.addr %s1332, 12
        %s1334 = smul.addr %s1333, 8
        %s1335 = scalar_lea.vmem %s5, %s1334
      $region52: #{residual_block.1} parent=47 // pred_fallthru
        _
    $region48: #{residual_block.1} parent=5 // pred_fallthru
      _
  $region6: #{residual_block.1} parent=0 // loop_footer
    %s15 = sadd.s32 1, %s11
  $region7: #{residual_block.1} parent=0 // loop_footer_branch
    %10 = sbr.rel target = $region3
  $region8: #{residual_block.1} parent=0 // loop_exit
    _

</llo_original>
